<compile_context>
chip_gen: v7x
topology: tpu7x:2x2x1
jax: 0.10.0
libtpu: 0.0.40
codegen_flags: <defaults>
</compile_context>

<pallas_src>
import functools
import math

import jax
import jax.numpy as jnp
from jax.experimental import pallas as pl
from jax.experimental.pallas import tpu as pltpu


# K-stack the 9 taps into one dot when the total input channels are <= this.
_STACK_CIN_MAX = 256


def _round_up(x, m):
    return (x + m - 1) // m * m


def _chip_defaults():
    """(cout_tile, vmem_limit_bytes) tuned per TPU generation (review items)."""
    try:
        kind = jax.devices()[0].device_kind.lower()
    except Exception:
        kind = ""
    if "v5 lite" in kind or "v5e" in kind or "v5lite" in kind:
        return 128, 100 << 20      # v5e: 128-wide MXU, 128 MiB physical VMEM
    if "v6" in kind:
        return 256, 96 << 20       # v6e: 2x256^2 MXU, 128 MiB physical VMEM
    return 256, 48 << 20           # v7x (64 MiB physical VMEM) / unknown


# ----------------------------- Pallas kernels ------------------------------- #

def _conv3x3_stacked_kernel(*refs, Wp, P, n_in):
    """Fused 3x3 conv + folded-BN bias + ReLU as ONE K-stacked MXU dot.

    refs = (x_ref_0..x_ref_{n_in-1}, w_ref, b_ref, o_ref)
      x_ref_i: ((R+3)*Wp, Cin_i) bf16  flat zero-padded row-tile slab
      w_ref:   (9*sum(Cin_i), TC) bf16 im2col weight (BN scale pre-folded),
               rows ordered [stream][tap = kh*3+kw][cin]
      b_ref:   (1, TC) f32             folded BN bias
      o_ref:   (P = R*Wp, TC) bf16     (junk columns >= W cropped in wrapper)

    n_in == 2 fuses the decoder skip concatenation: the conv weight is split
    along Cin, so the concatenated activation never round-trips through HBM.
    """
    x_refs = refs[:n_in]
    w_ref, b_ref, o_ref = refs[n_in], refs[n_in + 1], refs[n_in + 2]

    pieces = []
    for x_ref in x_refs:
        for kh in range(3):
            for kw in range(3):
                start = kh * Wp + kw                  # kh*Wp is 8-row aligned
                pieces.append(x_ref[pl.ds(start, P), :])
    patches = jnp.concatenate(pieces, axis=-1)        # (P, 9*sum(Cin)) bf16
    y = jnp.dot(patches, w_ref[...], preferred_element_type=jnp.float32)
    o_ref[...] = jnp.maximum(y + b_ref[...], 0.0).astype(o_ref.dtype)


def _conv3x3_taps_kernel(*refs, Wp, P, n_in):
    """Per-tap variant for the wide-Cin concat layers (K already fills MXU).

    refs = (x_ref_0.., w_ref_0.., b_ref, o_ref); w_ref_i: (9, Cin_i, TC) bf16.
    """
    x_refs = refs[:n_in]
    w_refs = refs[n_in:2 * n_in]
    b_ref, o_ref = refs[2 * n_in], refs[2 * n_in + 1]

    acc = None
    for x_ref, w_ref in zip(x_refs, w_refs):
        for kh in range(3):
            for kw in range(3):
                patch = x_ref[pl.ds(kh * Wp + kw, P), :]
                d = jnp.dot(patch, w_ref[kh * 3 + kw],
                            preferred_element_type=jnp.float32)
                acc = d if acc is None else acc + d   # init with first tap
    o_ref[...] = jnp.maximum(acc + b_ref[...], 0.0).astype(o_ref.dtype)


# ------------------------------ host wrapper -------------------------------- #

def conv3x3_bn_relu(xs, ws, bias, *, cout_tile=None, vmem_limit=None,
                    row_tile=None):
    """Fused conv3x3(s=1,p=1) + eval-mode BN + ReLU over 1 or 2 input streams.

    xs:   list of NHWC activations sharing (N, H, W)
    ws:   list of matching (9, Cin_i, Cout) weights (BN scale pre-folded)
    bias: (Cout,) folded BN bias (f32)
    Returns NHWC bf16 output of shape (N, H, W, Cout).
    """
    N, H, W, _ = xs[0].shape
    cins = [int(x.shape[-1]) for x in xs]
    cin_total = sum(cins)
    Cout = int(ws[0].shape[-1])
    assert [int(w.shape[1]) for w in ws] == cins
    assert all(int(w.shape[-1]) == Cout for w in ws)

    ct_def, vm_def = _chip_defaults()
    cout_tile = ct_def if cout_tile is None else cout_tile
    vmem_limit = vm_def if vmem_limit is None else vmem_limit

    # Sublane-aligned padded row stride (review: align the kh*Wp tap shifts).
    Wp = _round_up(W + 2, 8)

    # Cout tiling: MXU-width tiles on the wide layers, full width on the tail.
    if Cout % cout_tile == 0:
        TC = cout_tile
    elif Cout % 128 == 0:
        TC = 128
    else:
        TC = Cout
    n_ct = Cout // TC

    stack = cin_total <= _STACK_CIN_MAX

    # --- spatial row tiling with a 3-row halo: bound per-step VMEM ----------
    if row_tile is None:
        bytes_per_row = Wp * (
            2 * 2 * cin_total                            # slab(s) bf16, 2-buffered
            + (2 * 9 * cin_total if stack else 4 * TC)   # im2col patch / f32 acc
            + 4 * TC                                     # f32 epilogue value
            + 2 * 2 * TC)                                # out block bf16, 2-buffered
        budget = min(vmem_limit // 3, 24 << 20)
        row_tile = max(8, min(256, budget // max(bytes_per_row, 1)))
    R = int(min(row_tile, H))
    n_rt = -(-H // R)            # ceil
    H_eff = n_rt * R

    Pslab = (R + 3) * Wp         # flat pixels per input slab (halo + slack)
    P = R * Wp                   # flat output pixels per row tile

    def tile_input(x):
        # one pad + halo-tile copy per layer (replaces the previous jnp.pad)
        xp = jnp.pad(x.astype(jnp.bfloat16),
                     ((0, 0), (1, H_eff + 2 - H), (1, Wp - W - 1), (0, 0)))
        if n_rt == 1:
            return xp.reshape(N, 1, Pslab, x.shape[-1])
        slabs = [xp[:, t * R: t * R + R + 3] for t in range(n_rt)]
        return jnp.stack(slabs, axis=1).reshape(N, n_rt, Pslab, x.shape[-1])

    x_args = [tile_input(x) for x in xs]
    x_specs = [pl.BlockSpec((None, None, Pslab, ci), lambda n, t, c: (n, t, 0, 0))
               for ci in cins]

    bias2 = bias.reshape(1, Cout).astype(jnp.float32)

    if stack:
        # im2col weight: rows ordered [stream][tap][cin] to match the kernel.
        w_flat = jnp.concatenate(
            [w.astype(jnp.bfloat16).reshape(9 * int(w.shape[1]), Cout) for w in ws],
            axis=0)
        w_args = (w_flat,)
        w_specs = [pl.BlockSpec((9 * cin_total, TC), lambda n, t, c: (0, c))]
        kernel = functools.partial(_conv3x3_stacked_kernel, Wp=Wp, P=P, n_in=len(xs))
    else:
        w_args = tuple(w.astype(jnp.bfloat16) for w in ws)
        w_specs = [pl.BlockSpec((9, ci, TC), lambda n, t, c: (0, 0, c)) for ci in cins]
        kernel = functools.partial(_conv3x3_taps_kernel, Wp=Wp, P=P, n_in=len(xs))

    out = pl.pallas_call(
        kernel,
        out_shape=jax.ShapeDtypeStruct((N, n_rt, P, Cout), jnp.bfloat16),
        grid=(N, n_rt, n_ct),
        in_specs=x_specs + w_specs + [pl.BlockSpec((1, TC), lambda n, t, c: (0, c))],
        out_specs=pl.BlockSpec((None, None, P, TC), lambda n, t, c: (n, t, 0, c)),
        compiler_params=pltpu.CompilerParams(
            dimension_semantics=("parallel", "parallel", "parallel"),
            vmem_limit_bytes=int(vmem_limit),
        ),
    )(*x_args, *w_args, bias2)

    # drop the junk columns / padded rows produced by the flat-conv + row pad
    return out.reshape(N, H_eff, Wp, Cout)[:, :H, :W, :]


# ------------------------------ JAX glue ------------------------------------ #

def upsample_bilinear_x2(x):
    """nn.UpsamplingBilinear2d(scale_factor=2) == bilinear, align_corners=True."""
    N, H, W, C = x.shape
    Ho, Wo = 2 * H, 2 * W

    def axis_coords(n_in, n_out):
        denom = max(n_out - 1, 1)
        src = jnp.arange(n_out, dtype=jnp.float32) * ((n_in - 1) / denom)
        i0 = jnp.clip(jnp.floor(src).astype(jnp.int32), 0, max(n_in - 2, 0))
        frac = src - i0.astype(jnp.float32)
        return i0, jnp.minimum(i0 + 1, n_in - 1), frac

    h0, h1, fh = axis_coords(H, Ho)
    w0, w1, fw = axis_coords(W, Wo)
    xh0 = x[:, h0, :, :]
    xh1 = x[:, h1, :, :]
    fh = fh[None, :, None, None]
    fw = fw[None, None, :, None]
    top = xh0[:, :, w0, :] * (1 - fw) + xh0[:, :, w1, :] * fw
    bot = xh1[:, :, w0, :] * (1 - fw) + xh1[:, :, w1, :] * fw
    return (top * (1 - fh) + bot * fh).astype(x.dtype)


def _make_conv_bn_params(key, cin, cout):
    """Random Conv2dReLU params with eval-mode BN folded into the weights."""
    kw_, kg, kbe, km, kv = jax.random.split(key, 5)
    w = jax.random.normal(kw_, (3, 3, cin, cout), jnp.float32) / math.sqrt(cin * 9)
    gamma = jax.random.uniform(kg, (cout,), jnp.float32, 0.8, 1.2)
    beta = jax.random.normal(kbe, (cout,), jnp.float32) * 0.05
    mean = jax.random.normal(km, (cout,), jnp.float32) * 0.05
    var = jax.random.uniform(kv, (cout,), jnp.float32, 0.5, 1.5)
    eps = 1e-5
    scale = gamma / jnp.sqrt(var + eps)
    bias = beta - mean * scale
    w9 = (w * scale[None, None, None, :]).reshape(9, cin, cout)  # (kh*3+kw,Cin,Cout)
    return w9.astype(jnp.bfloat16), bias.astype(jnp.float32)


def init_decoder_cup_params(key,
                            decoder_channels=(256, 128, 64, 16),
                            encoder_channels=(32, 64, 160, 256)):
    head_channels, hidden_size = 512, 256
    enc_rev = encoder_channels[::-1]
    specs = [("conv_more", hidden_size, head_channels)]
    pr = head_channels
    for i, (sc, oc) in enumerate(zip(enc_rev, decoder_channels)):
        specs.append((f"block{i}_conv1", pr + sc, oc))
        specs.append((f"block{i}_conv2", oc, oc))
        pr = oc
    specs.append(("fin_conv_conv1", pr, decoder_channels[-1]))
    specs.append(("fin_conv_conv2", decoder_channels[-1], decoder_channels[-1]))
    specs.append(("fin_conv2", decoder_channels[-1], decoder_channels[-1]))

    keys = jax.random.split(key, len(specs))
    return {name: _make_conv_bn_params(k, cin, cout)
            for k, (name, cin, cout) in zip(keys, specs)}


def decoder_cup_forward(x_nchw, encoder_list_nchw, params):
    """Matches DecoderCup.forward.  NCHW in / NCHW out (f32)."""
    x = jnp.transpose(x_nchw, (0, 2, 3, 1)).astype(jnp.bfloat16)
    encs = [jnp.transpose(e, (0, 2, 3, 1)).astype(jnp.bfloat16)
            for e in encoder_list_nchw]

    w9, b = params["conv_more"]
    x = conv3x3_bn_relu([x], [w9], b)

    enc_inv = encs[::-1]
    up_flags = (False, True, True, True)
    for i, (skip, up) in enumerate(zip(enc_inv, up_flags)):
        if up:
            x = upsample_bilinear_x2(x)
        # cat([x, skip], dim=1) fused into the conv: split W along Cin
        w9, b = params[f"block{i}_conv1"]
        cx = x.shape[-1]
        x = conv3x3_bn_relu([x, skip], [w9[:, :cx, :], w9[:, cx:, :]], b)
        w9, b = params[f"block{i}_conv2"]
        x = conv3x3_bn_relu([x], [w9], b)

    # fin_conv: ConvBlock(up_flag=True, no skip)
    x = upsample_bilinear_x2(x)
    w9, b = params["fin_conv_conv1"]
    x = conv3x3_bn_relu([x], [w9], b)
    w9, b = params["fin_conv_conv2"]
    x = conv3x3_bn_relu([x], [w9], b)
    # fin_conv2
    w9, b = params["fin_conv2"]
    x = conv3x3_bn_relu([x], [w9], b)

    return jnp.transpose(x, (0, 3, 1, 2)).astype(jnp.float32)


# ------------------------- reference for self-check ------------------------- #

def _ref_conv3x3_bn_relu(x_f32, w9_f32, bias_f32):
    w = w9_f32.reshape(3, 3, w9_f32.shape[1], w9_f32.shape[2])
    y = jax.lax.conv_general_dilated(
        x_f32, w, window_strides=(1, 1), padding=((1, 1), (1, 1)),
        dimension_numbers=("NHWC", "HWIO", "NHWC"))
    return jnp.maximum(y + bias_f32, 0.0)


# --------------------------------- main -------------------------------------- #

if __name__ == "__main__":
    # ---- self-checks of the fused Pallas conv against the XLA conv (bf16) ----
    def _check(xs, ws, b, **kw):
        got = conv3x3_bn_relu(list(xs), list(ws), b, **kw).astype(jnp.float32)
        xcat = jnp.concatenate(xs, axis=-1).astype(jnp.bfloat16).astype(jnp.float32)
        wcat = jnp.concatenate(ws, axis=1).astype(jnp.bfloat16).astype(jnp.float32)
        ref = _ref_conv3x3_bn_relu(xcat, wcat, b)
        err = float(jnp.max(jnp.abs(got - ref)))
        assert err < 5e-2, f"fused conv self-check failed, max abs err = {err}"

    kc = jax.random.PRNGKey(7)
    k1, k2, k3, k4, k5, k6, k7, k8 = jax.random.split(kc, 8)
    # (a) K-stacked path, row tiling with remainder tile, small Cout
    _check([jax.random.normal(k1, (1, 12, 12, 16), jnp.float32)],
           [jax.random.normal(k2, (9, 16, 32), jnp.float32) / math.sqrt(9 * 16)],
           jax.random.normal(k3, (32,), jnp.float32) * 0.1,
           row_tile=5)
    # (b) fused skip-concat (2 streams), 2 Cout tiles, K-stacked path
    wb = jax.random.normal(k6, (9, 96, 256), jnp.float32) / math.sqrt(9 * 96)
    _check([jax.random.normal(k4, (1, 8, 8, 64), jnp.float32),
            jax.random.normal(k5, (1, 8, 8, 32), jnp.float32)],
           [wb[:, :64, :], wb[:, 64:, :]],
           jnp.zeros((256,), jnp.float32),
           row_tile=4, cout_tile=128)
    # (c) wide-Cin per-tap path
    _check([jax.random.normal(k7, (1, 8, 8, 320), jnp.float32)],
           [jax.random.normal(k8, (9, 320, 128), jnp.float32) / math.sqrt(9 * 320)],
           jnp.zeros((128,), jnp.float32),
           row_tile=8)

    # ---- full DecoderCup forward at small shapes ----
    key = jax.random.PRNGKey(0)
    kp, kx, ke0, ke1, ke2, ke3 = jax.random.split(key, 6)
    N, H, W = 2, 4, 4
    # x: transformer output, (N, hidden_size=256, H, W)
    x = jax.random.normal(kx, (N, 256, H, W), jnp.float32)
    # encoder_list in ascending depth: channels (32, 64, 160, 256) at
    # spatial resolutions (8H, 4H, 2H, H) so the skip concats line up.
    encoder_list = [
        jax.random.normal(ke0, (N, 32, 8 * H, 8 * W), jnp.float32),
        jax.random.normal(ke1, (N, 64, 4 * H, 4 * W), jnp.float32),
        jax.random.normal(ke2, (N, 160, 2 * H, 2 * W), jnp.float32),
        jax.random.normal(ke3, (N, 256, H, W), jnp.float32),
    ]

    params = init_decoder_cup_params(kp)
    out = jax.block_until_ready(jax.jit(decoder_cup_forward)(x, encoder_list, params))
    assert out.shape == (N, 16, 16 * H, 16 * W), out.shape
    assert bool(jnp.all(jnp.isfinite(out)))
    print("KERNEL_OK")
</pallas_src>

<mosaic_0001>
module attributes {stable_mosaic.version = 11 : i64} {
  func.func @_conv3x3_stacked_kernel(%arg0: i32, %arg1: i32, %arg2: i32, %arg3: memref<1x1x128x16xbf16, #tpu.memory_space<vmem>>, %arg4: memref<144x32xbf16, #tpu.memory_space<vmem>>, %arg5: memref<1x32xf32, #tpu.memory_space<vmem>>, %arg6: memref<1x1x80x32xbf16, #tpu.memory_space<vmem>>) attributes {dimension_semantics = [#tpu.dimension_semantics<parallel>, #tpu.dimension_semantics<parallel>, #tpu.dimension_semantics<parallel>], iteration_bounds = array<i64: 1, 3, 1>, scalar_prefetch = 0 : i64, scratch_operands = 0 : i64, tpu.core_type = #tpu.core_type<tc>, window_params = [{transform_indices = @transform_0, window_bounds = array<i64: 1, 1, 128, 16>}, {transform_indices = @transform_1, window_bounds = array<i64: 144, 32>}, {transform_indices = @transform_2, window_bounds = array<i64: 1, 32>}, {transform_indices = @transform_3, window_bounds = array<i64: 1, 1, 80, 32>}]} {
    %c0 = arith.constant 0 : index
    %c0_0 = arith.constant 0 : index
    %c0_1 = arith.constant 0 : index
    %c0_2 = arith.constant 0 : index
    %0 = vector.load %arg3[%c0, %c0_0, %c0_1, %c0_2] : memref<1x1x128x16xbf16, #tpu.memory_space<vmem>>, vector<1x1x80x16xbf16>
    %1 = vector.shape_cast %0 : vector<1x1x80x16xbf16> to vector<80x16xbf16>
    %c0_3 = arith.constant 0 : index
    %c0_4 = arith.constant 0 : index
    %c1 = arith.constant 1 : index
    %c0_5 = arith.constant 0 : index
    %2 = vector.load %arg3[%c0_3, %c0_4, %c1, %c0_5] : memref<1x1x128x16xbf16, #tpu.memory_space<vmem>>, vector<1x1x80x16xbf16>
    %3 = vector.shape_cast %2 : vector<1x1x80x16xbf16> to vector<80x16xbf16>
    %c0_6 = arith.constant 0 : index
    %c0_7 = arith.constant 0 : index
    %c2 = arith.constant 2 : index
    %c0_8 = arith.constant 0 : index
    %4 = vector.load %arg3[%c0_6, %c0_7, %c2, %c0_8] : memref<1x1x128x16xbf16, #tpu.memory_space<vmem>>, vector<1x1x80x16xbf16>
    %5 = vector.shape_cast %4 : vector<1x1x80x16xbf16> to vector<80x16xbf16>
    %c0_9 = arith.constant 0 : index
    %c0_10 = arith.constant 0 : index
    %c16 = arith.constant 16 : index
    %c0_11 = arith.constant 0 : index
    %6 = vector.load %arg3[%c0_9, %c0_10, %c16, %c0_11] : memref<1x1x128x16xbf16, #tpu.memory_space<vmem>>, vector<1x1x80x16xbf16>
    %7 = vector.shape_cast %6 : vector<1x1x80x16xbf16> to vector<80x16xbf16>
    %c0_12 = arith.constant 0 : index
    %c0_13 = arith.constant 0 : index
    %c17 = arith.constant 17 : index
    %c0_14 = arith.constant 0 : index
    %8 = vector.load %arg3[%c0_12, %c0_13, %c17, %c0_14] : memref<1x1x128x16xbf16, #tpu.memory_space<vmem>>, vector<1x1x80x16xbf16>
    %9 = vector.shape_cast %8 : vector<1x1x80x16xbf16> to vector<80x16xbf16>
    %c0_15 = arith.constant 0 : index
    %c0_16 = arith.constant 0 : index
    %c18 = arith.constant 18 : index
    %c0_17 = arith.constant 0 : index
    %10 = vector.load %arg3[%c0_15, %c0_16, %c18, %c0_17] : memref<1x1x128x16xbf16, #tpu.memory_space<vmem>>, vector<1x1x80x16xbf16>
    %11 = vector.shape_cast %10 : vector<1x1x80x16xbf16> to vector<80x16xbf16>
    %c0_18 = arith.constant 0 : index
    %c0_19 = arith.constant 0 : index
    %c32 = arith.constant 32 : index
    %c0_20 = arith.constant 0 : index
    %12 = vector.load %arg3[%c0_18, %c0_19, %c32, %c0_20] : memref<1x1x128x16xbf16, #tpu.memory_space<vmem>>, vector<1x1x80x16xbf16>
    %13 = vector.shape_cast %12 : vector<1x1x80x16xbf16> to vector<80x16xbf16>
    %c0_21 = arith.constant 0 : index
    %c0_22 = arith.constant 0 : index
    %c33 = arith.constant 33 : index
    %c0_23 = arith.constant 0 : index
    %14 = vector.load %arg3[%c0_21, %c0_22, %c33, %c0_23] : memref<1x1x128x16xbf16, #tpu.memory_space<vmem>>, vector<1x1x80x16xbf16>
    %15 = vector.shape_cast %14 : vector<1x1x80x16xbf16> to vector<80x16xbf16>
    %c0_24 = arith.constant 0 : index
    %c0_25 = arith.constant 0 : index
    %c34 = arith.constant 34 : index
    %c0_26 = arith.constant 0 : index
    %16 = vector.load %arg3[%c0_24, %c0_25, %c34, %c0_26] : memref<1x1x128x16xbf16, #tpu.memory_space<vmem>>, vector<1x1x80x16xbf16>
    %17 = vector.shape_cast %16 : vector<1x1x80x16xbf16> to vector<80x16xbf16>
    %18 = tpu.concatenate %1, %3, %5, %7, %9, %11, %13, %15, %17 in 1 : vector<80x16xbf16>, vector<80x16xbf16>, vector<80x16xbf16>, vector<80x16xbf16>, vector<80x16xbf16>, vector<80x16xbf16>, vector<80x16xbf16>, vector<80x16xbf16>, vector<80x16xbf16> -> vector<80x144xbf16>
    %c0_27 = arith.constant 0 : index
    %c0_28 = arith.constant 0 : index
    %19 = vector.load %arg4[%c0_27, %c0_28] : memref<144x32xbf16, #tpu.memory_space<vmem>>, vector<144x32xbf16>
    %cst = arith.constant dense<0.000000e+00> : vector<80x32xf32>
    %20 = tpu.matmul %18, %19, %cst {dimension_numbers = #tpu.dot_dimension_numbers<[1], [0], [0], [1], [0, 0, 1, 1], [], []>} : vector<80x144xbf16>, vector<144x32xbf16>, vector<80x32xf32> -> vector<80x32xf32>
    %c0_29 = arith.constant 0 : index
    %c0_30 = arith.constant 0 : index
    %21 = vector.load %arg5[%c0_29, %c0_30] : memref<1x32xf32, #tpu.memory_space<vmem>>, vector<1x32xf32>
    %22 = vector.broadcast %21 : vector<1x32xf32> to vector<80x32xf32>
    %23 = arith.addf %20, %22 : vector<80x32xf32>
    %cst_31 = arith.constant 0.000000e+00 : f32
    %24 = vector.broadcast %cst_31 : f32 to vector<80x32xf32>
    %25 = arith.maximumf %23, %24 : vector<80x32xf32>
    %26 = arith.truncf %25 : vector<80x32xf32> to vector<80x32xbf16>
    %c0_32 = arith.constant 0 : index
    %c0_33 = arith.constant 0 : index
    %c0_34 = arith.constant 0 : index
    %c0_35 = arith.constant 0 : index
    %27 = vector.load %arg6[%c0_32, %c0_33, %c0_34, %c0_35] : memref<1x1x80x32xbf16, #tpu.memory_space<vmem>>, vector<1x1x80x32xbf16>
    %28 = vector.shape_cast %27 : vector<1x1x80x32xbf16> to vector<80x32xbf16>
    %29 = vector.shape_cast %26 : vector<80x32xbf16> to vector<1x1x80x32xbf16>
    tpu.vector_store %arg6[%c0_32, %c0_33, %c0_34, %c0_35], %29 {strides = array<i32>} : memref<1x1x80x32xbf16, #tpu.memory_space<vmem>>, vector<1x1x80x32xbf16>,
    return
  }
  func.func @transform_0(%arg0: i32, %arg1: i32, %arg2: i32) -> (i32, i32, i32, i32) {
    %c0_i32 = arith.constant 0 : i32
    %c0_i32_0 = arith.constant 0 : i32
    %c0_i32_1 = arith.constant 0 : i32
    return %arg0, %arg1, %c0_i32, %c0_i32_0 : i32, i32, i32, i32
  }
  func.func @transform_1(%arg0: i32, %arg1: i32, %arg2: i32) -> (i32, i32) {
    %c0_i32 = arith.constant 0 : i32
    %c0_i32_0 = arith.constant 0 : i32
    return %c0_i32, %arg2 : i32, i32
  }
  func.func @transform_2(%arg0: i32, %arg1: i32, %arg2: i32) -> (i32, i32) {
    %c0_i32 = arith.constant 0 : i32
    %c0_i32_0 = arith.constant 0 : i32
    return %c0_i32, %arg2 : i32, i32
  }
  func.func @transform_3(%arg0: i32, %arg1: i32, %arg2: i32) -> (i32, i32, i32, i32) {
    %c0_i32 = arith.constant 0 : i32
    %c0_i32_0 = arith.constant 0 : i32
    return %arg0, %arg1, %c0_i32, %arg2 : i32, i32, i32, i32
  }
}

</mosaic_0001>

<llo_original>
// kernel: tpu_custom_call.1
$region0: #{tpu_custom_call.1}
  #allocation0 [shape = 'u32[]', space=smem, size = 0x4, offset = 0x4, fixed_abs, tag = 'smem constant byte address 0x4 - core index']
  #allocation1 [shape = 'u32[144,128]{1,0:T(1,128)}', space=vmem, size = 0x12000, scoped, tag = 'internal scratch']
  %s0 = inlined_call_operand.vmem [shape: bf16[1,3,128,16], index: 0, kind: input, shape index: {}]
  %s1 = inlined_call_operand.vmem [shape: bf16[144,32], index: 1, kind: input, shape index: {}]
  %s2 = inlined_call_operand.vmem [shape: f32[1,32], index: 2, kind: input, shape index: {}]
  %s3 = inlined_call_operand.vmem [shape: bf16[1,3,80,32], index: 3, kind: output, shape index: {}]
  %s4 = sld [smem:[#allocation0]]
  $region45: #{tpu_custom_call.1} parent=0
    _
  %s6 = ssub.s32 1, %s4
  %s7 = scalar_select 0, %s6, %s4
  loop: start=0, step=1, limit=5
  $region2: #{tpu_custom_call.1} parent=0 // loop_pre_header
    _
  $region3: #{tpu_custom_call.1} parent=0 // loop_header
    %s9 = sphi 0, %s13
    %p10 = scmp.ge.s32.totalorder %s9, 5
    %s16 = sphi 0, %s35
    %s17 = sphi 0, %s31
    %s18 = sphi 0, %s27
    %s19 = sphi 0, %s16
    %s20 = sphi 0, %s17
    %s21 = sphi 0, %s18
    %s22 = sphi 0, %s19
    %s23 = sphi 0, %s20
    %s24 = sphi 0, %s21
    %s40 = sphi 0, %s42
    %s43 = sphi 0, %s40
    %s44 = sphi 0, %s43
    %s60 = sphi 0, %s44
    %s66 = sphi 0, %s68
    %s69 = sphi 0, %s66
    %s70 = sphi 0, %s69
    %s86 = sphi 0, %s70
    %s92 = sphi 0, %s94
    %s95 = sphi 0, %s92
    %s96 = sphi 0, %s95
    %s112 = sphi 0, %s96
    %s122 = sphi 0, %s124
    %s125 = sphi 0, %s122
    %s126 = sphi 0, %s125
    %s142 = sphi 0, %s126
  $region4: #{tpu_custom_call.1} parent=0 // loop_header_branch
    %12 = sbr.rel (%p10) target = $region8
  $region5: #{tpu_custom_call.1} parent=0 // loop_body
    %s14 = ssub.s32 %s9, 1
    %s15 = ssub.s32 %s9, 2
    %s25 = sadd.s32 1, %s18
    %p26 = scmp.ge.s32.totalorder %s25, 1
    %s27 = scalar_select %p26, 0, %s25
    %s28 = sadd.s32 1, %s17
    %s29 = scalar_select %p26, %s28, %s17
    %p30 = scmp.ge.s32.totalorder %s29, 3
    %s31 = scalar_select %p30, 0, %s29
    %s32 = sadd.s32 1, %s16
    %s33 = scalar_select %p30, %s32, %s16
    %p34 = scmp.ge.s32.totalorder %s33, 1
    %s35 = scalar_select %p34, 0, %s33
    %s36 = ssub.s32 %s16, %s35
    %s37 = ssub.s32 %s17, %s31
    %s38 = sor.u32 %s36, %s37
    %p39 = scmp.eq.s32.totalorder %s38, 0
    %s41 = sadd.s32 %s40, 1
    %s42 = scalar_select %p39, %s40, %s41
    %p45 = pneg %p39
    %p46 = scmp.eq.s32.totalorder %s9, 2
    %p47 = por %p45, %p46
    %p48 = scmp.ne.s32.totalorder %s40, %s43
    %p49 = scmp.eq.s32.totalorder %s9, 0
    %p50 = por %p48, %p49
    %p51 = scmp.ne.s32.totalorder %s40, %s43
    %p52 = scmp.eq.s32.totalorder %s14, 2
    %p53 = por %p51, %p52
    %p54 = scmp.ne.s32.totalorder %s43, %s44
    %p55 = scmp.eq.s32.totalorder %s14, 0
    %p56 = por %p54, %p55
    %p57 = scmp.ne.s32.totalorder %s43, %s44
    %p58 = scmp.eq.s32.totalorder %s15, 2
    %p59 = por %p57, %p58
    %p61 = scmp.ne.s32.totalorder %s44, %s60
    %p62 = scmp.eq.s32.totalorder %s15, 0
    %p63 = por %p61, %p62
    %s64 = ssub.s32 %s18, %s27
    %p65 = scmp.eq.s32.totalorder %s64, 0
    %s67 = sadd.s32 %s66, 1
    %s68 = scalar_select %p65, %s66, %s67
    %p71 = pneg %p65
    %p72 = scmp.eq.s32.totalorder %s9, 2
    %p73 = por %p71, %p72
    %p74 = scmp.ne.s32.totalorder %s66, %s69
    %p75 = scmp.eq.s32.totalorder %s9, 0
    %p76 = por %p74, %p75
    %p77 = scmp.ne.s32.totalorder %s66, %s69
    %p78 = scmp.eq.s32.totalorder %s14, 2
    %p79 = por %p77, %p78
    %p80 = scmp.ne.s32.totalorder %s69, %s70
    %p81 = scmp.eq.s32.totalorder %s14, 0
    %p82 = por %p80, %p81
    %p83 = scmp.ne.s32.totalorder %s69, %s70
    %p84 = scmp.eq.s32.totalorder %s15, 2
    %p85 = por %p83, %p84
    %p87 = scmp.ne.s32.totalorder %s70, %s86
    %p88 = scmp.eq.s32.totalorder %s15, 0
    %p89 = por %p87, %p88
    %s90 = ssub.s32 %s18, %s27
    %p91 = scmp.eq.s32.totalorder %s90, 0
    %s93 = sadd.s32 %s92, 1
    %s94 = scalar_select %p91, %s92, %s93
    %p97 = pneg %p91
    %p98 = scmp.eq.s32.totalorder %s9, 2
    %p99 = por %p97, %p98
    %p100 = scmp.ne.s32.totalorder %s92, %s95
    %p101 = scmp.eq.s32.totalorder %s9, 0
    %p102 = por %p100, %p101
    %p103 = scmp.ne.s32.totalorder %s92, %s95
    %p104 = scmp.eq.s32.totalorder %s14, 2
    %p105 = por %p103, %p104
    %p106 = scmp.ne.s32.totalorder %s95, %s96
    %p107 = scmp.eq.s32.totalorder %s14, 0
    %p108 = por %p106, %p107
    %p109 = scmp.ne.s32.totalorder %s95, %s96
    %p110 = scmp.eq.s32.totalorder %s15, 2
    %p111 = por %p109, %p110
    %p113 = scmp.ne.s32.totalorder %s96, %s112
    %p114 = scmp.eq.s32.totalorder %s15, 0
    %p115 = por %p113, %p114
    %s116 = ssub.s32 %s16, %s35
    %s117 = ssub.s32 %s17, %s31
    %s118 = sor.u32 %s116, %s117
    %s119 = ssub.s32 %s18, %s27
    %s120 = sor.u32 %s118, %s119
    %p121 = scmp.eq.s32.totalorder %s120, 0
    %s123 = sadd.s32 %s122, 1
    %s124 = scalar_select %p121, %s122, %s123
    %p127 = pneg %p121
    %p128 = scmp.eq.s32.totalorder %s9, 2
    %p129 = por %p127, %p128
    %p130 = scmp.ne.s32.totalorder %s122, %s125
    %p131 = scmp.eq.s32.totalorder %s9, 0
    %p132 = por %p130, %p131
    %p133 = scmp.ne.s32.totalorder %s122, %s125
    %p134 = scmp.eq.s32.totalorder %s14, 2
    %p135 = por %p133, %p134
    %p136 = scmp.ne.s32.totalorder %s125, %s126
    %p137 = scmp.eq.s32.totalorder %s14, 0
    %p138 = por %p136, %p137
    %p139 = scmp.ne.s32.totalorder %s125, %s126
    %p140 = scmp.eq.s32.totalorder %s15, 2
    %p141 = por %p139, %p140
    %p143 = scmp.ne.s32.totalorder %s126, %s142
    %p144 = scmp.eq.s32.totalorder %s15, 0
    %p145 = por %p143, %p144
    %p146 = scmp.le.s32.totalorder 1, %s9
    %p147 = scmp.lt.s32.totalorder %s9, 4
    %p148 = pnand %p146, %p147
    %p149 = pneg %p148
    // Predicated region
    $region9: #{tpu_custom_call.1} parent=5 // pred_check
      _
    $region10: #{tpu_custom_call.1} parent=5 // pred_check_branch
      %151 = sbr.rel (%p148) target = $region12
    $region11: #{tpu_custom_call.1} parent=5 // pred_region
      %s152 = ssub.s32 %s9, 1
      // Predicated region
      $region13: #{tpu_custom_call.1} parent=11 // pred_check
        %p153 = pneg %p82
      $region14: #{tpu_custom_call.1} parent=11 // pred_check_branch
        %155 = sbr.rel (%p153) target = $region16
      $region15: #{tpu_custom_call.1} parent=11 // pred_region
        %p156 = scmp.lt.s32.totalorder %s21, 0
        %s157 = scalar_select %p156, %s21, 0
        %s158 = smul.addr %s157, 4
        %s159 = scalar_lea.vmem %s1, %s158
      $region16: #{tpu_custom_call.1} parent=11 // pred_fallthru
        _
      // Predicated region
      $region17: #{tpu_custom_call.1} parent=11 // pred_check
        %p160 = pneg %p108
      $region18: #{tpu_custom_call.1} parent=11 // pred_check_branch
        %162 = sbr.rel (%p160) target = $region20
      $region19: #{tpu_custom_call.1} parent=11 // pred_region
        %p163 = scmp.lt.s32.totalorder %s21, 0
        %s164 = scalar_select %p163, %s21, 0
        %s165 = scalar_lea.vmem %s2, %s164
      $region20: #{tpu_custom_call.1} parent=11 // pred_fallthru
        _
    $region12: #{tpu_custom_call.1} parent=5 // pred_fallthru
      _
    %p166 = scmp.lt.s32.totalorder %s9, 3
    // Predicated region
    $region21: #{tpu_custom_call.1} parent=5 // pred_check
      %p167 = pneg %p166
    $region22: #{tpu_custom_call.1} parent=5 // pred_check_branch
      %169 = sbr.rel (%p167) target = $region24
    $region23: #{tpu_custom_call.1} parent=5 // pred_region
      // Predicated region
      $region25: #{tpu_custom_call.1} parent=23 // pred_check
        %p170 = pneg %p50
      $region26: #{tpu_custom_call.1} parent=23 // pred_check_branch
        %172 = sbr.rel (%p170) target = $region28
      $region27: #{tpu_custom_call.1} parent=23 // pred_region
        %p173 = scmp.lt.s32.totalorder %s16, 0
        %s174 = scalar_select %p173, %s16, 0
        %p175 = scmp.lt.s32.totalorder %s17, 2
        %s176 = scalar_select %p175, %s17, 2
        %s177 = smul.addr %s176, 16
        %s178 = smul.addr %s174, 48
        %s179 = sadd.s32 %s177, %s178
        %s180 = smul.addr %s179, 4
        %s181 = scalar_lea.vmem %s0, %s180
      $region28: #{tpu_custom_call.1} parent=23 // pred_fallthru
        _
    $region24: #{tpu_custom_call.1} parent=5 // pred_fallthru
      _
    %p182 = scmp.le.s32.totalorder 1, %s9
    %p183 = scmp.lt.s32.totalorder %s9, 4
    %p184 = pnand %p182, %p183
    %p185 = pneg %p184
    // Predicated region
    $region29: #{tpu_custom_call.1} parent=5 // pred_check
      _
    $region30: #{tpu_custom_call.1} parent=5 // pred_check_branch
      %187 = sbr.rel (%p184) target = $region32
    $region31: #{tpu_custom_call.1} parent=5 // pred_region
      %s188 = ssub.s32 %s9, 1
      %p189 = scmp.lt.s32.totalorder %s19, 0
      %s190 = scalar_select %p189, %s19, 0
      %p191 = scmp.lt.s32.totalorder %s20, 2
      %s192 = scalar_select %p191, %s20, 2
      %s193 = smul.addr %s192, 16
      %s194 = smul.addr %s190, 48
      %s195 = sadd.s32 %s193, %s194
      %s196 = smul.addr %s195, 4
      %s197 = scalar_lea.vmem %s0, %s196
      %p198 = pneg %p56
      %p199 = pneg %p53
      %p200 = scmp.lt.s32.totalorder %s21, 0
      %s201 = scalar_select %p200, %s21, 0
      %s202 = smul.addr %s201, 4
      %s203 = scalar_lea.vmem %s1, %s202
      %p204 = pneg %p82
      %p205 = pneg %p79
      %p206 = scmp.lt.s32.totalorder %s21, 0
      %s207 = scalar_select %p206, %s21, 0
      %s208 = scalar_lea.vmem %s2, %s207
      %p209 = pneg %p108
      %p210 = pneg %p105
      %p211 = pneg %p138
      %p212 = pneg %p135
      %p213 = scmp.lt.s32.totalorder %s19, 0
      %s214 = scalar_select %p213, %s19, 0
      %p215 = scmp.lt.s32.totalorder %s20, 2
      %s216 = scalar_select %p215, %s20, 2
      %p217 = scmp.lt.s32.totalorder %s21, 0
      %s218 = scalar_select %p217, %s21, 0
      %s219 = smul.addr %s216, 10
      %s220 = sadd.s32 %s218, %s219
      %s221 = smul.addr %s214, 30
      %s222 = sadd.s32 %s220, %s221
      %s223 = smul.addr %s222, 4
      %s224 = scalar_lea.vmem %s3, %s223
      %p225 = scmp.lt.s32.totalorder %s19, 0
      %s226 = scalar_select %p225, %s19, 0
      %p227 = scmp.lt.s32.totalorder %s20, 2
      %s228 = scalar_select %p227, %s20, 2
      %s229 = smul.addr %s228, 16
      %s230 = smul.addr %s226, 48
      %s231 = sadd.s32 %s229, %s230
      %s232 = smul.addr %s231, 4
      %s233 = scalar_lea.vmem %s0, %s232
      %p234 = scmp.lt.s32.totalorder %s21, 0
      %s235 = scalar_select %p234, %s21, 0
      %s236 = smul.addr %s235, 4
      %s237 = scalar_lea.vmem %s1, %s236
      %p238 = scmp.lt.s32.totalorder %s21, 0
      %s239 = scalar_select %p238, %s21, 0
      %s240 = scalar_lea.vmem %s2, %s239
      %p241 = scmp.lt.s32.totalorder %s19, 0
      %s242 = scalar_select %p241, %s19, 0
      %p243 = scmp.lt.s32.totalorder %s20, 2
      %s244 = scalar_select %p243, %s20, 2
      %p245 = scmp.lt.s32.totalorder %s21, 0
      %s246 = scalar_select %p245, %s21, 0
      %s247 = smul.addr %s244, 10
      %s248 = sadd.s32 %s246, %s247
      %s249 = smul.addr %s242, 30
      %s250 = sadd.s32 %s248, %s249
      %s251 = smul.addr %s250, 4
      %s252 = scalar_lea.vmem %s3, %s251
      %v254 = vld [vmem:[%s233] sm:$0xf]
      %v255 = vld [vmem:[%s233 + $0x4] sm:$0xf]
      %v256 = vld [vmem:[%s233 + $0x8] sm:$0xf]
      %v257 = vld [vmem:[%s233 + $0xc] sm:$0xf]
      %v258 = vld [vmem:[%s233 + $0x10] sm:$0xf]
      %v259 = vld [vmem:[%s233 + $0x14] sm:$0xf]
      %v260 = vld [vmem:[%s233 + $0x18] sm:$0xf]
      %v261 = vld [vmem:[%s233 + $0x1c] sm:$0xf]
      %v262 = vld [vmem:[%s233 + $0x20] sm:$0xf]
      %v263 = vld [vmem:[%s233 + $0x24] sm:$0xf]
      %v264 = vld [vmem:[%s233 + $0x28] sm:$0x1]
      %v265 = vld [vmem:[%s233] sm:$0xe]
      %v266 = vld [vmem:[%s233 + $0x28] sm:$0xf]
      %v267 = vld [vmem:[%s233 + $0x2c] sm:$0xf]
      %v268 = vld [vmem:[%s233 + $0x30] sm:$0x1]
      %v269 = vld [vmem:[%s233 + $0x8] sm:$0xe]
      %v270 = vld [vmem:[%s233 + $0x30] sm:$0xf]
      %v271 = vld [vmem:[%s233 + $0x34] sm:$0xf]
      %v272 = vld [vmem:[%s233 + $0x38] sm:$0x1]
      %v273 = vld [vmem:[%s233 + $0x10] sm:$0xe]
      %v284 = vunpack.c.l.b16 %v254
      %v285 = vunpack.c.l.b16 %v255
      %v286 = vunpack.c.l.b16 %v256
      %v287 = vunpack.c.l.b16 %v257
      %v288 = vunpack.c.l.b16 %v258
      %v289 = vunpack.c.l.b16 %v259
      %v290 = vunpack.c.l.b16 %v260
      %v291 = vunpack.c.l.b16 %v261
      %v292 = vunpack.c.l.b16 %v262
      %v293 = vunpack.c.l.b16 %v263
      %v294 = vpack.c.b16 %v285, %v284
      %v295 = vpack.c.b16 %v287, %v286
      %v296 = vpack.c.b16 %v289, %v288
      %v297 = vpack.c.b16 %v291, %v290
      %v298 = vpack.c.b16 %v293, %v292
      %v300 = vunpack.c.l.b16 %v264
      %v301 = vpack.c.b16 %v300, %v300
      %vm302 = vsmask.f32 7424
      %v304 = vshrl.u32 %v294, 16
      %v306 = vshll.u32 %v294, 16
      %v308 = vrot.slane %v306, 1
      %v309 = vor.u32 %v304, %v308
      %v311 = vshll.u32 %v295, 16
      %v313 = vrot.slane %v311, 1
      %v314 = vsel %vm302, %v309, %v313
      %v315 = vshrl.u32 %v295, 16
      %v317 = vor.u32 %v315, %v313
      %v319 = vshll.u32 %v296, 16
      %v321 = vrot.slane %v319, 1
      %v322 = vsel %vm302, %v317, %v321
      %v323 = vshrl.u32 %v296, 16
      %v325 = vor.u32 %v323, %v321
      %v327 = vshll.u32 %v297, 16
      %v329 = vrot.slane %v327, 1
      %v330 = vsel %vm302, %v325, %v329
      %v331 = vshrl.u32 %v297, 16
      %v333 = vor.u32 %v331, %v329
      %v335 = vshll.u32 %v298, 16
      %v337 = vrot.slane %v335, 1
      %v338 = vsel %vm302, %v333, %v337
      %v339 = vshrl.u32 %v298, 16
      %v341 = vor.u32 %v339, %v337
      %v343 = vshll.u32 %v301, 16
      %v345 = vrot.slane %v343, 1
      %v346 = vsel %vm302, %v341, %v345
      %347 = vrot.lane.b32.xlu0 %v314, 16
      %v348 = vpop.permute.xlu0 %347
      %349 = vrot.lane.b32.xlu0 %v322, 16
      %v350 = vpop.permute.xlu0 %349
      %351 = vrot.lane.b32.xlu0 %v330, 16
      %v352 = vpop.permute.xlu0 %351
      %353 = vrot.lane.b32.xlu0 %v338, 16
      %v354 = vpop.permute.xlu0 %353
      %355 = vrot.lane.b32.xlu0 %v346, 16
      %v356 = vpop.permute.xlu0 %355
      %v358 = vunpack.c.l.b16 %v265
      %v359 = vpack.c.b16 %v285, %v358
      %vm360 = vcmask 1046528
      %v361 = vrot.slane %v359, 1
      %v362 = vrot.slane %v295, 1
      %v363 = vsel %vm360, %v361, %v362
      %v364 = vrot.slane %v296, 1
      %v365 = vsel %vm360, %v362, %v364
      %v366 = vrot.slane %v297, 1
      %v367 = vsel %vm360, %v364, %v366
      %v368 = vrot.slane %v298, 1
      %v369 = vsel %vm360, %v366, %v368
      %v370 = vrot.slane %v301, 1
      %v371 = vsel %vm360, %v368, %v370
      %372 = vrot.lane.b32.xlu0 %v363, 32
      %v373 = vpop.permute.xlu0 %372
      %374 = vrot.lane.b32.xlu0 %v365, 32
      %v375 = vpop.permute.xlu0 %374
      %376 = vrot.lane.b32.xlu0 %v367, 32
      %v377 = vpop.permute.xlu0 %376
      %378 = vrot.lane.b32.xlu0 %v369, 32
      %v379 = vpop.permute.xlu0 %378
      %380 = vrot.lane.b32.xlu0 %v371, 32
      %v381 = vpop.permute.xlu0 %380
      %v384 = vunpack.c.l.b16 %v266
      %v385 = vunpack.c.l.b16 %v267
      %v386 = vpack.c.b16 %v385, %v384
      %387 = vrot.lane.b32.xlu0 %v295, 48
      %v388 = vpop.permute.xlu0 %387
      %389 = vrot.lane.b32.xlu0 %v296, 48
      %v390 = vpop.permute.xlu0 %389
      %391 = vrot.lane.b32.xlu0 %v297, 48
      %v392 = vpop.permute.xlu0 %391
      %393 = vrot.lane.b32.xlu0 %v298, 48
      %v394 = vpop.permute.xlu0 %393
      %395 = vrot.lane.b32.xlu0 %v386, 48
      %v396 = vpop.permute.xlu0 %395
      %v398 = vunpack.c.l.b16 %v268
      %v399 = vpack.c.b16 %v398, %v398
      %v401 = vshll.u32 %v386, 16
      %v403 = vrot.slane %v401, 1
      %v404 = vsel %vm302, %v341, %v403
      %v405 = vshrl.u32 %v386, 16
      %v407 = vor.u32 %v405, %v403
      %v409 = vshll.u32 %v399, 16
      %v411 = vrot.slane %v409, 1
      %v412 = vsel %vm302, %v407, %v411
      %413 = vrot.lane.b32.xlu0 %v322, 64
      %v414 = vpop.permute.xlu0 %413
      %415 = vrot.lane.b32.xlu0 %v330, 64
      %v416 = vpop.permute.xlu0 %415
      %417 = vrot.lane.b32.xlu0 %v338, 64
      %v418 = vpop.permute.xlu0 %417
      %419 = vrot.lane.b32.xlu0 %v404, 64
      %v420 = vpop.permute.xlu0 %419
      %421 = vrot.lane.b32.xlu0 %v412, 64
      %v422 = vpop.permute.xlu0 %421
      %v424 = vunpack.c.l.b16 %v269
      %v425 = vpack.c.b16 %v287, %v424
      %v426 = vrot.slane %v425, 1
      %v427 = vsel %vm360, %v426, %v364
      %v428 = vrot.slane %v386, 1
      %v429 = vsel %vm360, %v368, %v428
      %v430 = vrot.slane %v399, 1
      %v431 = vsel %vm360, %v428, %v430
      %432 = vrot.lane.b32.xlu0 %v427, 80
      %v433 = vpop.permute.xlu0 %432
      %434 = vrot.lane.b32.xlu0 %v367, 80
      %v435 = vpop.permute.xlu0 %434
      %436 = vrot.lane.b32.xlu0 %v369, 80
      %v437 = vpop.permute.xlu0 %436
      %438 = vrot.lane.b32.xlu0 %v429, 80
      %v439 = vpop.permute.xlu0 %438
      %440 = vrot.lane.b32.xlu0 %v431, 80
      %v441 = vpop.permute.xlu0 %440
      %v444 = vunpack.c.l.b16 %v270
      %v445 = vunpack.c.l.b16 %v271
      %v446 = vpack.c.b16 %v445, %v444
      %447 = vrot.lane.b32.xlu0 %v296, 96
      %v448 = vpop.permute.xlu0 %447
      %449 = vrot.lane.b32.xlu0 %v297, 96
      %v450 = vpop.permute.xlu0 %449
      %451 = vrot.lane.b32.xlu0 %v298, 96
      %v452 = vpop.permute.xlu0 %451
      %453 = vrot.lane.b32.xlu0 %v386, 96
      %v454 = vpop.permute.xlu0 %453
      %455 = vrot.lane.b32.xlu0 %v446, 96
      %v456 = vpop.permute.xlu0 %455
      %v458 = vunpack.c.l.b16 %v272
      %v459 = vpack.c.b16 %v458, %v458
      %v461 = vshll.u32 %v446, 16
      %v463 = vrot.slane %v461, 1
      %v464 = vsel %vm302, %v407, %v463
      %v465 = vshrl.u32 %v446, 16
      %v467 = vor.u32 %v465, %v463
      %v469 = vshll.u32 %v459, 16
      %v471 = vrot.slane %v469, 1
      %v472 = vsel %vm302, %v467, %v471
      %473 = vrot.lane.b32.xlu0 %v330, 112
      %v474 = vpop.permute.xlu0 %473
      %475 = vrot.lane.b32.xlu0 %v338, 112
      %v476 = vpop.permute.xlu0 %475
      %477 = vrot.lane.b32.xlu0 %v404, 112
      %v478 = vpop.permute.xlu0 %477
      %479 = vrot.lane.b32.xlu0 %v464, 112
      %v480 = vpop.permute.xlu0 %479
      %481 = vrot.lane.b32.xlu0 %v472, 112
      %v482 = vpop.permute.xlu0 %481
      %v484 = vunpack.c.l.b16 %v273
      %v485 = vpack.c.b16 %v289, %v484
      %v486 = vrot.slane %v485, 1
      %v487 = vsel %vm360, %v486, %v366
      %v488 = vrot.slane %v446, 1
      %v489 = vsel %vm360, %v428, %v488
      %v490 = vrot.slane %v459, 1
      %v491 = vsel %vm360, %v488, %v490
      %vm492 = vcmask 130048
      %v494 = vsel %vm492, %v294, %v348
      %v496 = vsel %vm492, %v295, %v350
      %v498 = vsel %vm492, %v296, %v352
      %v500 = vsel %vm492, %v297, %v354
      %v502 = vsel %vm492, %v298, %v356
      %vm503 = vcmask 261120
      %v505 = vsel %vm503, %v494, %v373
      %v507 = vsel %vm503, %v496, %v375
      %v509 = vsel %vm503, %v498, %v377
      %v511 = vsel %vm503, %v500, %v379
      %v513 = vsel %vm503, %v502, %v381
      %vm514 = vcmask 392192
      %v516 = vsel %vm514, %v505, %v388
      %v518 = vsel %vm514, %v507, %v390
      %v520 = vsel %vm514, %v509, %v392
      %v522 = vsel %vm514, %v511, %v394
      %v524 = vsel %vm514, %v513, %v396
      %vm525 = vcmask 523264
      %v527 = vsel %vm525, %v516, %v414
      %v529 = vsel %vm525, %v518, %v416
      %v531 = vsel %vm525, %v520, %v418
      %v533 = vsel %vm525, %v522, %v420
      %v535 = vsel %vm525, %v524, %v422
      %vm536 = vcmask 654336
      %v538 = vsel %vm536, %v527, %v433
      %v540 = vsel %vm536, %v529, %v435
      %v542 = vsel %vm536, %v531, %v437
      %v544 = vsel %vm536, %v533, %v439
      %v546 = vsel %vm536, %v535, %v441
      %vm547 = vcmask 785408
      %v549 = vsel %vm547, %v538, %v448
      %v551 = vsel %vm547, %v540, %v450
      %v553 = vsel %vm547, %v542, %v452
      %v555 = vsel %vm547, %v544, %v454
      %v557 = vsel %vm547, %v546, %v456
      %vm558 = vcmask 916480
      %v560 = vsel %vm558, %v549, %v474
      %v563 = vsel %vm558, %v551, %v476
      %v566 = vsel %vm558, %v553, %v478
      %v569 = vsel %vm558, %v555, %v480
      %v572 = vsel %vm558, %v557, %v482
      %v574 = vld [vmem:[%s237] sm:$0xf]
      %v575 = vld [vmem:[%s237 + $0x4] sm:$0xf]
      %v576 = vld [vmem:[%s237 + $0x8] sm:$0xf]
      %v577 = vld [vmem:[%s237 + $0xc] sm:$0xf]
      %v578 = vld [vmem:[%s237 + $0x10] sm:$0xf]
      %v579 = vld [vmem:[%s237 + $0x14] sm:$0xf]
      %v580 = vld [vmem:[%s237 + $0x18] sm:$0xf]
      %v581 = vld [vmem:[%s237 + $0x1c] sm:$0xf]
      %v582 = vld [vmem:[%s237 + $0x20] sm:$0xf]
      %v583 = vld [vmem:[%s237 + $0x24] sm:$0xf]
      %v584 = vld [vmem:[%s237 + $0x28] sm:$0xf]
      %v585 = vld [vmem:[%s237 + $0x2c] sm:$0xf]
      %v586 = vld [vmem:[%s237 + $0x30] sm:$0xf]
      %v587 = vld [vmem:[%s237 + $0x34] sm:$0xf]
      %v588 = vld [vmem:[%s237 + $0x38] sm:$0xf]
      %v589 = vld [vmem:[%s237 + $0x3c] sm:$0xf]
      %v590 = vld [vmem:[%s237 + $0x40] sm:$0xf]
      %v591 = vld [vmem:[%s237 + $0x44] sm:$0xf]
      %v592 = vld [vmem:[%s240] sm:$0x1]
      %v594 = vlaneseq
      %v595 = vshrl.u32 %v594, 7
      %v596 = vsub.s32 0, %v595
      %v597 = vrot.slane %v592, %v596
      %v617 = vunpack.c.l.b16 %v574
      %v618 = vunpack.c.l.b16 %v575
      %v619 = vunpack.c.l.b16 %v576
      %v620 = vunpack.c.l.b16 %v577
      %v621 = vunpack.c.l.b16 %v578
      %v622 = vunpack.c.l.b16 %v579
      %v623 = vunpack.c.l.b16 %v580
      %v624 = vunpack.c.l.b16 %v581
      %v625 = vunpack.c.l.b16 %v582
      %v626 = vunpack.c.l.b16 %v583
      %v627 = vunpack.c.l.b16 %v584
      %v628 = vunpack.c.l.b16 %v585
      %v629 = vunpack.c.l.b16 %v586
      %v630 = vunpack.c.l.b16 %v587
      %v631 = vunpack.c.l.b16 %v588
      %v632 = vunpack.c.l.b16 %v589
      %v633 = vunpack.c.l.b16 %v590
      %v634 = vunpack.c.l.b16 %v591
      %v635 = vpack.c.b16 %v618, %v617
      %v636 = vpack.c.b16 %v620, %v619
      %v637 = vpack.c.b16 %v622, %v621
      %v638 = vpack.c.b16 %v624, %v623
      %v639 = vpack.c.b16 %v626, %v625
      %v640 = vpack.c.b16 %v628, %v627
      %v641 = vpack.c.b16 %v630, %v629
      %v642 = vpack.c.b16 %v632, %v631
      %v643 = vpack.c.b16 %v634, %v633
      %v654 = vsel %vm492, %v487, 0
      %v657 = vsel %vm492, %v369, 0
      %v660 = vsel %vm492, %v429, 0
      %v663 = vsel %vm492, %v489, 0
      %v666 = vsel %vm492, %v491, 0
      %668 = vmatprep.subr.bf16.mxu0 0
      %669 = vmatpush1.bf16.msra.mxu0 %v635
      %670 = vmatprep.subr.bf16.mxu0 0
      %671 = vmatpush1.bf16.msra.mxu0 %v636
      %672 = vmatprep.subr.bf16.mxu0 0
      %673 = vmatpush1.bf16.msra.mxu0 %v637
      %674 = vmatprep.subr.bf16.mxu0 0
      %675 = vmatpush1.bf16.msra.mxu0 %v638
      %676 = vmatprep.subr.bf16.mxu0 0
      %677 = vmatpush1.bf16.msra.mxu0 %v639
      %678 = vmatprep.subr.bf16.mxu0 0
      %679 = vmatpush1.bf16.msra.mxu0 %v640
      %680 = vmatprep.subr.bf16.mxu0 0
      %681 = vmatpush1.bf16.msra.mxu0 %v641
      %682 = vmatprep.subr.bf16.mxu0 0
      %683 = vmatpush1.bf16.msra.mxu0 %v642
      %684 = vmatprep.subr.bf16.mxu0 0
      %685 = vmatpush1.bf16.msra.mxu0 %v643
      %686 = vmatprep.subr.bf16.mxu0 0
      %687 = vmatpush1.bf16.msra.mxu0 0
      %688 = vmatprep.subr.bf16.mxu0 0
      %689 = vmatpush1.bf16.msra.mxu0 0
      %690 = vmatprep.subr.bf16.mxu0 0
      %691 = vmatpush1.bf16.msra.mxu0 0
      %692 = vmatprep.subr.bf16.mxu0 0
      %693 = vmatpush1.bf16.msra.mxu0 0
      %694 = vmatprep.subr.bf16.mxu0 0
      %695 = vmatpush1.bf16.msra.mxu0 0
      %696 = vmatprep.subr.bf16.mxu0 0
      %697 = vmatpush1.bf16.msra.mxu0 0
      %698 = vmatprep.subr.bf16.mxu0 0
      %699 = vmatpush1.bf16.msra.mxu0 0
      %700 = vmatprep.mubr.bf16.mxu0 %v654
      %701 = vmatmul.mubr.bf16.gmra.mrb[0].mxu0 %v560
      %v702 = vpop.f32.mrb[0].mxu0
      %v703 = vadd.f32 %v597, %v702
      %v704 = vpop.f32.mrb[0].mxu0
      %v705 = vpop.f32.mrb[0].mxu0
      %v706 = vadd.f32 %v597, %v705
      %v707 = vpop.f32.mrb[0].mxu0
      %708 = vmatprep.mubr.bf16.mxu0 %v657
      %709 = vmatmul.mubr.bf16.gmra.mrb[0].mxu0 %v563
      %v710 = vpop.f32.mrb[0].mxu0
      %v711 = vadd.f32 %v597, %v710
      %v712 = vpop.f32.mrb[0].mxu0
      %v713 = vpop.f32.mrb[0].mxu0
      %v714 = vadd.f32 %v597, %v713
      %v715 = vpop.f32.mrb[0].mxu0
      %716 = vmatprep.mubr.bf16.mxu0 %v660
      %717 = vmatmul.mubr.bf16.gmra.mrb[0].mxu0 %v566
      %v718 = vpop.f32.mrb[0].mxu0
      %v719 = vadd.f32 %v597, %v718
      %v720 = vpop.f32.mrb[0].mxu0
      %v721 = vpop.f32.mrb[0].mxu0
      %v722 = vadd.f32 %v597, %v721
      %v723 = vpop.f32.mrb[0].mxu0
      %724 = vmatprep.mubr.bf16.mxu0 %v663
      %725 = vmatmul.mubr.bf16.gmra.mrb[0].mxu0 %v569
      %v726 = vpop.f32.mrb[0].mxu0
      %v727 = vadd.f32 %v597, %v726
      %v728 = vpop.f32.mrb[0].mxu0
      %v729 = vpop.f32.mrb[0].mxu0
      %v730 = vadd.f32 %v597, %v729
      %v731 = vpop.f32.mrb[0].mxu0
      %732 = vmatprep.mubr.bf16.mxu0 %v666
      %733 = vmatmul.mubr.bf16.gmra.mrb[0].mxu0 %v572
      %v734 = vpop.f32.mrb[0].mxu0
      %v735 = vadd.f32 %v597, %v734
      %v736 = vpop.f32.mrb[0].mxu0
      %v737 = vpop.f32.mrb[0].mxu0
      %v738 = vadd.f32 %v597, %v737
      %v739 = vpop.f32.mrb[0].mxu0
      %740 = vdwg.mxu0
      %v741 = vmax.f32 %v703, 0.0
      %v742 = vmax.f32 %v706, 0.0
      %v743 = vmax.f32 %v711, 0.0
      %v744 = vmax.f32 %v714, 0.0
      %v745 = vmax.f32 %v719, 0.0
      %v746 = vmax.f32 %v722, 0.0
      %v747 = vmax.f32 %v727, 0.0
      %v748 = vmax.f32 %v730, 0.0
      %v749 = vmax.f32 %v735, 0.0
      %v750 = vmax.f32 %v738, 0.0
      %v751 = vpack.c.bf16 %v742, %v741
      %v752 = vpack.c.bf16 %v744, %v743
      %v753 = vpack.c.bf16 %v746, %v745
      %v754 = vpack.c.bf16 %v748, %v747
      %v755 = vpack.c.bf16 %v750, %v749
      %v761 = vunpack.c.l.b16 %v751
      %v762 = vunpack.c.h.b16 %v751
      %v763 = vunpack.c.l.b16 %v752
      %v764 = vunpack.c.h.b16 %v752
      %v765 = vunpack.c.l.b16 %v753
      %v766 = vunpack.c.h.b16 %v753
      %v767 = vunpack.c.l.b16 %v754
      %v768 = vunpack.c.h.b16 %v754
      %v769 = vunpack.c.l.b16 %v755
      %v770 = vunpack.c.h.b16 %v755
      %v771 = vpack.c.b16 %v761, %v761
      %v772 = vpack.c.b16 %v762, %v762
      %v773 = vpack.c.b16 %v763, %v763
      %v774 = vpack.c.b16 %v764, %v764
      %v775 = vpack.c.b16 %v765, %v765
      %v776 = vpack.c.b16 %v766, %v766
      %v777 = vpack.c.b16 %v767, %v767
      %v778 = vpack.c.b16 %v768, %v768
      %v779 = vpack.c.b16 %v769, %v769
      %v780 = vpack.c.b16 %v770, %v770
      %vm791 = vcmask 257024
      %792 = vst.msk [vmem:[%s252] sm:$0xf] %vm791, %v771
      %793 = vst.msk [vmem:[%s252 + $0x4] sm:$0xf] %vm791, %v772
      %794 = vst.msk [vmem:[%s252 + $0x8] sm:$0xf] %vm791, %v773
      %795 = vst.msk [vmem:[%s252 + $0xc] sm:$0xf] %vm791, %v774
      %796 = vst.msk [vmem:[%s252 + $0x10] sm:$0xf] %vm791, %v775
      %797 = vst.msk [vmem:[%s252 + $0x14] sm:$0xf] %vm791, %v776
      %798 = vst.msk [vmem:[%s252 + $0x18] sm:$0xf] %vm791, %v777
      %799 = vst.msk [vmem:[%s252 + $0x1c] sm:$0xf] %vm791, %v778
      %800 = vst.msk [vmem:[%s252 + $0x20] sm:$0xf] %vm791, %v779
      %801 = vst.msk [vmem:[%s252 + $0x24] sm:$0xf] %vm791, %v780
      %p802 = scmp.lt.s32.totalorder %s19, 0
      %s803 = scalar_select %p802, %s19, 0
      %p804 = scmp.lt.s32.totalorder %s20, 2
      %s805 = scalar_select %p804, %s20, 2
      %p806 = scmp.lt.s32.totalorder %s21, 0
      %s807 = scalar_select %p806, %s21, 0
      %s808 = smul.addr %s805, 10
      %s809 = sadd.s32 %s807, %s808
      %s810 = smul.addr %s803, 30
      %s811 = sadd.s32 %s809, %s810
      %s812 = smul.addr %s811, 4
      %s813 = scalar_lea.vmem %s3, %s812
      // Predicated region
      $region33: #{tpu_custom_call.1} parent=31 // pred_check
        %p814 = pneg %p135
      $region34: #{tpu_custom_call.1} parent=31 // pred_check_branch
        %816 = sbr.rel (%p814) target = $region36
      $region35: #{tpu_custom_call.1} parent=31 // pred_region
        _
      $region36: #{tpu_custom_call.1} parent=31 // pred_fallthru
        _
    $region32: #{tpu_custom_call.1} parent=5 // pred_fallthru
      _
    %p817 = scmp.le.s32.totalorder 2, %s9
    // Predicated region
    $region37: #{tpu_custom_call.1} parent=5 // pred_check
      %p818 = pneg %p817
    $region38: #{tpu_custom_call.1} parent=5 // pred_check_branch
      %820 = sbr.rel (%p818) target = $region40
    $region39: #{tpu_custom_call.1} parent=5 // pred_region
      %s821 = ssub.s32 %s9, 2
      // Predicated region
      $region41: #{tpu_custom_call.1} parent=39 // pred_check
        %p822 = pneg %p141
      $region42: #{tpu_custom_call.1} parent=39 // pred_check_branch
        %824 = sbr.rel (%p822) target = $region44
      $region43: #{tpu_custom_call.1} parent=39 // pred_region
        %p825 = scmp.lt.s32.totalorder %s22, 0
        %s826 = scalar_select %p825, %s22, 0
        %p827 = scmp.lt.s32.totalorder %s23, 2
        %s828 = scalar_select %p827, %s23, 2
        %p829 = scmp.lt.s32.totalorder %s24, 0
        %s830 = scalar_select %p829, %s24, 0
        %s831 = smul.addr %s828, 10
        %s832 = sadd.s32 %s830, %s831
        %s833 = smul.addr %s826, 30
        %s834 = sadd.s32 %s832, %s833
        %s835 = smul.addr %s834, 4
        %s836 = scalar_lea.vmem %s3, %s835
      $region44: #{tpu_custom_call.1} parent=39 // pred_fallthru
        _
    $region40: #{tpu_custom_call.1} parent=5 // pred_fallthru
      _
  $region6: #{tpu_custom_call.1} parent=0 // loop_footer
    %s13 = sadd.s32 1, %s9
  $region7: #{tpu_custom_call.1} parent=0 // loop_footer_branch
    %8 = sbr.rel target = $region3
  $region8: #{tpu_custom_call.1} parent=0 // loop_exit
    _

</llo_original>
